<compile_context>
chip_gen: v7x
topology: tpu7x:2x2x1
jax: 0.10.0
libtpu: 0.0.40
codegen_flags: <defaults>
</compile_context>

<pallas_src>
import numpy as np

import jax
import jax.numpy as jnp
from jax.experimental import pallas as pl
from jax.experimental.pallas import tpu as pltpu


# ----------------------- trace-time operator construction -----------------------
def _row_op_replicate(n: int, taps) -> np.ndarray:
    """(n, n) operator: out[i] = sum_t taps[t] * x[clamp(i + t - r, 0, n-1)]."""
    r = len(taps) // 2
    m = np.zeros((n, n), dtype=np.float32)
    for i in range(n):
        for t, w in enumerate(taps):
            k = min(max(i + t - r, 0), n - 1)
            m[i, k] += w
    return m


def _row_op_reflect(n: int, taps) -> np.ndarray:
    """(n, n) operator with PyTorch-style 'reflect' padding (no edge repeat)."""
    r = len(taps) // 2
    if n <= r:
        raise ValueError(f"reflect padding needs dim > {r}, got {n}")
    m = np.zeros((n, n), dtype=np.float32)
    for i in range(n):
        for t, w in enumerate(taps):
            k = i + t - r
            if k < 0:
                k = -k
            if k >= n:
                k = 2 * n - 2 - k
            m[i, k] += w
    return m


def _gaussian_taps(ksize: int, sigma: float) -> np.ndarray:
    xs = np.arange(ksize, dtype=np.float64) - ksize // 2
    g = np.exp(-(xs * xs) / (2.0 * sigma * sigma))
    return (g / g.sum()).astype(np.float32)


def _block_diag(m: np.ndarray, reps: int) -> np.ndarray:
    w = m.shape[0]
    out = np.zeros((w * reps, w * reps), dtype=np.float32)
    for p in range(reps):
        out[p * w:(p + 1) * w, p * w:(p + 1) * w] = m
    return out


def _grad_taps(grads_mode: str):
    if grads_mode == "sobel":
        smooth, diff, norm = (1.0, 2.0, 1.0), (-1.0, 0.0, 1.0), 8.0
    elif grads_mode == "diff":
        smooth, diff, norm = (0.0, 1.0, 0.0), (-1.0, 0.0, 1.0), 2.0
    else:
        raise NotImplementedError(f"grads_mode={grads_mode!r}")
    return smooth, tuple(d / norm for d in diff)


def _build_operators(H: int, W: int, Pg: int, grads_mode: str):
    smooth, diff_n = _grad_taps(grads_mode)
    gauss = _gaussian_taps(7, 1.0)
    sv = _row_op_replicate(H, smooth)          # vertical smooth  (left-multiply)
    dv = _row_op_replicate(H, diff_n)          # vertical diff    (left-multiply)
    gv = _row_op_reflect(H, gauss)             # vertical gaussian(left-multiply)
    sd = np.concatenate([sv, dv], axis=0)      # (2H, H) stacked  (left-multiply)
    dh = _row_op_replicate(W, diff_n).T        # horizontal diff   (right-multiply)
    sh = _row_op_replicate(W, smooth).T        # horizontal smooth (right-multiply)
    gh = _row_op_reflect(W, gauss).T           # horizontal gauss  (right-multiply)
    return sd, gv, _block_diag(dh, Pg), _block_diag(sh, Pg), _block_diag(gh, Pg)


# ----------------------------------- kernel -------------------------------------
def _gftt_kernel(x_ref, sd_ref, dh_ref, sh_ref, gv_ref, gh_ref, out_ref):
    # x_ref/out_ref block: (1, H, WL) with WL = Pg*W (Pg planes side-by-side on lanes).
    H = gv_ref.shape[0]
    WL = gh_ref.shape[0]
    cdt = sd_ref.dtype                                   # MXU operand dtype (f32/bf16)

    x = x_ref[0].astype(cdt)                             # (H, WL)

    # Vertical smooth + diff in ONE matmul: [Sv; Dv] @ X -> (2H, WL)
    v = jnp.dot(sd_ref[...], x, preferred_element_type=jnp.float32)
    vs = v[:H].astype(cdt)                               # smooth_v(x)  -> dx path
    vd = v[H:].astype(cdt)                               # diff_v(x)    -> dy path

    # Horizontal passes (block-diagonal per-plane operators, batched over planes).
    dx = jnp.dot(vs, dh_ref[...], preferred_element_type=jnp.float32)
    dy = jnp.dot(vd, sh_ref[...], preferred_element_type=jnp.float32)

    # 7x7 separable Gaussian, reflect padding folded into the operators.
    # Lane-concat the three products so the vertical pass is one matmul.
    prods = jnp.concatenate([dx * dx, dy * dy, dx * dy], axis=1).astype(cdt)  # (H, 3WL)
    vb = jnp.dot(gv_ref[...], prods, preferred_element_type=jnp.float32)      # (H, 3WL)

    gh = gh_ref[...]
    dx2 = jnp.dot(vb[:, :WL].astype(cdt), gh, preferred_element_type=jnp.float32)
    dy2 = jnp.dot(vb[:, WL:2 * WL].astype(cdt), gh, preferred_element_type=jnp.float32)
    dxy = jnp.dot(vb[:, 2 * WL:].astype(cdt), gh, preferred_element_type=jnp.float32)

    # Min eigenvalue of [[dx2, dxy],[dxy, dy2]]  (== e2 since disc >= 0).
    tr = dx2 + dy2
    det = dx2 * dy2 - dxy * dxy
    disc = jnp.sqrt(jnp.abs(tr * tr - 4.0 * det))
    out_ref[0] = (0.5 * (tr - disc)).astype(out_ref.dtype)


# ---------------------------------- wrapper --------------------------------------
def gftt_response(x: jax.Array, grads_mode: str = "sobel", sigmas=None,
                  mxu_dtype=jnp.float32) -> jax.Array:
    """Shi-Tomasi corner response, semantics of kornia.feature.gftt_response (NCHW)."""
    if x.ndim != 4:
        raise ValueError(f"expected (B, C, H, W), got {x.shape}")
    B, C, H, W = x.shape
    N = B * C

    # ---- planes per group: make blocks lane-dense (Pg*W >= 128) when possible ----
    lanes_min = max(1, -(-128 // W))                       # planes for >=128 lanes
    lane_target = max(lanes_min, 512 // W) if W < 512 else 1
    Pg = max(1, min(N, lane_target))
    # bound the per-group f32 working set (~28 planes of (H, Pg*W) f32) to ~8 MiB
    while Pg > 1 and 28 * H * Pg * W * 4 > 8 * 2**20:
        Pg -= 1
    # prefer >=2 grid steps (v7x has 2 TensorCores) when lane density is preserved
    if N // Pg < 2 and (N // 2) * W >= 128:
        Pg = max(1, N // 2)
    while N % Pg:
        Pg -= 1
    G = N // Pg
    WL = Pg * W

    # ---- operators (boundary conditions folded in, built once at trace time) -----
    sd_np, gv_np, dh_np, sh_np, gh_np = _build_operators(H, W, Pg, grads_mode)
    sd = jnp.asarray(sd_np, dtype=mxu_dtype)               # (2H, H)
    gv = jnp.asarray(gv_np, dtype=mxu_dtype)               # (H, H)
    dh = jnp.asarray(dh_np, dtype=mxu_dtype)               # (WL, WL) block-diag
    sh = jnp.asarray(sh_np, dtype=mxu_dtype)               # (WL, WL) block-diag
    gh = jnp.asarray(gh_np, dtype=mxu_dtype)               # (WL, WL) block-diag

    # Repack: (N, H, W) -> (G, H, Pg*W); plane p of group g sits at lanes [p*W,(p+1)*W).
    xg = x.reshape(G, Pg, H, W).transpose(0, 2, 1, 3).reshape(G, H, WL)

    # ---- VMEM budget: IO blocks (double-buffered) + operators + f32 intermediates --
    op_itemsize = np.dtype(mxu_dtype).itemsize
    io_bytes = 2 * 2 * H * WL * x.dtype.itemsize
    op_bytes = 2 * (3 * H * H + 3 * WL * WL) * op_itemsize
    live_bytes = 28 * H * WL * 4
    vmem_limit = io_bytes + op_bytes + live_bytes + (4 << 20)
    try:
        cap = int(pltpu.get_tpu_info().vmem_capacity_bytes)   # 128 MiB v5e/v6e, 64 MiB v7x
    except Exception:
        cap = 64 * 2**20
    vmem_limit = int(min(max(vmem_limit, 16 * 2**20), (3 * cap) // 4))

    out = pl.pallas_call(
        _gftt_kernel,
        out_shape=jax.ShapeDtypeStruct((G, H, WL), x.dtype),
        grid=(G,),
        in_specs=[
            pl.BlockSpec((1, H, WL), lambda i: (i, 0, 0)),    # image slab
            pl.BlockSpec((2 * H, H), lambda i: (0, 0)),       # sd = [Sv; Dv]
            pl.BlockSpec((WL, WL), lambda i: (0, 0)),         # dh (block-diag)
            pl.BlockSpec((WL, WL), lambda i: (0, 0)),         # sh (block-diag)
            pl.BlockSpec((H, H), lambda i: (0, 0)),           # gv
            pl.BlockSpec((WL, WL), lambda i: (0, 0)),         # gh (block-diag)
        ],
        out_specs=pl.BlockSpec((1, H, WL), lambda i: (i, 0, 0)),
        compiler_params=pltpu.CompilerParams(
            dimension_semantics=("parallel",),
            vmem_limit_bytes=vmem_limit,
        ),
    )(xg, sd, dh, sh, gv, gh)

    scores = out.reshape(G, H, Pg, W).transpose(0, 2, 1, 3).reshape(B, C, H, W)
    if sigmas is not None:
        s = jnp.asarray(sigmas).astype(scores.dtype)
        scores = scores * (s ** 4).reshape(-1, 1, 1, 1)
    return scores


class CornerGFTT:
    """Pallas-TPU equivalent of kornia.feature.CornerGFTT (forward pass)."""

    def __init__(self, grads_mode: str = "sobel") -> None:
        self.grads_mode = grads_mode

    def __repr__(self) -> str:
        return f"{self.__class__.__name__}(grads_mode={self.grads_mode})"

    def __call__(self, input: jax.Array, sigmas=None) -> jax.Array:
        return gftt_response(input, self.grads_mode, sigmas)

    forward = __call__


# ------------------------- pure-JAX reference (validation) ------------------------
def _reference_gftt(x: jax.Array, grads_mode: str = "sobel") -> jax.Array:
    B, C, H, W = x.shape
    sd, gv, dh, sh, gh = _build_operators(H, W, 1, grads_mode)
    sv_j, dv_j = jnp.asarray(sd[:H]), jnp.asarray(sd[H:])
    gv_j, dh_j, sh_j, gh_j = map(jnp.asarray, (gv, dh, sh, gh))
    xf = x.reshape(B * C, H, W).astype(jnp.float32)
    dx = jnp.einsum("hk,nkw,wv->nhv", sv_j, xf, dh_j)
    dy = jnp.einsum("hk,nkw,wv->nhv", dv_j, xf, sh_j)

    def blur(z):
        return jnp.einsum("hk,nkw,wv->nhv", gv_j, z, gh_j)

    dx2, dy2, dxy = blur(dx * dx), blur(dy * dy), blur(dx * dy)
    tr = dx2 + dy2
    det = dx2 * dy2 - dxy * dxy
    disc = jnp.sqrt(jnp.abs(tr * tr - 4.0 * det))
    return (0.5 * (tr - disc)).reshape(B, C, H, W)


# ----------------------------------- main ----------------------------------------
if __name__ == "__main__":
    key = jax.random.PRNGKey(0)
    x = jax.random.normal(key, (2, 4, 16, 16), dtype=jnp.float32)

    module = CornerGFTT(grads_mode="sobel")
    out = module(x)
    jax.block_until_ready(out)

    assert out.shape == x.shape and out.dtype == x.dtype
    assert bool(jnp.isfinite(out).all())

    ref = _reference_gftt(x, "sobel")
    max_err = float(jnp.max(jnp.abs(out.astype(jnp.float32) - ref)))
    assert max_err < 1e-3, f"mismatch vs reference: max abs err = {max_err}"

    print("KERNEL_OK")
</pallas_src>

<mosaic_0001>
module attributes {stable_mosaic.version = 11 : i64} {
  func.func @_gftt_kernel(%arg0: i32, %arg1: memref<1x16x128xf32, #tpu.memory_space<vmem>>, %arg2: memref<32x16xf32, #tpu.memory_space<vmem>>, %arg3: memref<128x128xf32, #tpu.memory_space<vmem>>, %arg4: memref<128x128xf32, #tpu.memory_space<vmem>>, %arg5: memref<16x16xf32, #tpu.memory_space<vmem>>, %arg6: memref<128x128xf32, #tpu.memory_space<vmem>>, %arg7: memref<1x16x128xf32, #tpu.memory_space<vmem>>) attributes {dimension_semantics = [#tpu.dimension_semantics<parallel>], iteration_bounds = array<i64: 1>, scalar_prefetch = 0 : i64, scratch_operands = 0 : i64, tpu.core_type = #tpu.core_type<tc>, window_params = [{transform_indices = @transform_0, window_bounds = array<i64: 1, 16, 128>}, {pipeline_mode = #tpu.pipeline_mode<synchronous>, transform_indices = @transform_1, window_bounds = array<i64: 32, 16>}, {pipeline_mode = #tpu.pipeline_mode<synchronous>, transform_indices = @transform_2, window_bounds = array<i64: 128, 128>}, {pipeline_mode = #tpu.pipeline_mode<synchronous>, transform_indices = @transform_3, window_bounds = array<i64: 128, 128>}, {pipeline_mode = #tpu.pipeline_mode<synchronous>, transform_indices = @transform_4, window_bounds = array<i64: 16, 16>}, {pipeline_mode = #tpu.pipeline_mode<synchronous>, transform_indices = @transform_5, window_bounds = array<i64: 128, 128>}, {transform_indices = @transform_6, window_bounds = array<i64: 1, 16, 128>}]} {
    %c0 = arith.constant 0 : index
    %c0_0 = arith.constant 0 : index
    %c0_1 = arith.constant 0 : index
    %0 = vector.load %arg1[%c0, %c0_0, %c0_1] : memref<1x16x128xf32, #tpu.memory_space<vmem>>, vector<1x16x128xf32>
    %1 = vector.shape_cast %0 : vector<1x16x128xf32> to vector<16x128xf32>
    %c0_2 = arith.constant 0 : index
    %c0_3 = arith.constant 0 : index
    %2 = vector.load %arg2[%c0_2, %c0_3] : memref<32x16xf32, #tpu.memory_space<vmem>>, vector<32x16xf32>
    %cst = arith.constant dense<0.000000e+00> : vector<32x128xf32>
    %3 = tpu.matmul %2, %1, %cst {dimension_numbers = #tpu.dot_dimension_numbers<[1], [0], [0], [1], [0, 0, 1, 1], [], []>} : vector<32x16xf32>, vector<16x128xf32>, vector<32x128xf32> -> vector<32x128xf32>
    %4 = vector.extract_strided_slice %3 {offsets = [0, 0], sizes = [16, 128], strides = [1, 1]} : vector<32x128xf32> to vector<16x128xf32>
    %5 = vector.extract_strided_slice %3 {offsets = [16, 0], sizes = [16, 128], strides = [1, 1]} : vector<32x128xf32> to vector<16x128xf32>
    %c0_4 = arith.constant 0 : index
    %c0_5 = arith.constant 0 : index
    %6 = vector.load %arg3[%c0_4, %c0_5] : memref<128x128xf32, #tpu.memory_space<vmem>>, vector<128x128xf32>
    %cst_6 = arith.constant dense<0.000000e+00> : vector<16x128xf32>
    %7 = tpu.matmul %4, %6, %cst_6 {dimension_numbers = #tpu.dot_dimension_numbers<[1], [0], [0], [1], [0, 0, 1, 1], [], []>} : vector<16x128xf32>, vector<128x128xf32>, vector<16x128xf32> -> vector<16x128xf32>
    %c0_7 = arith.constant 0 : index
    %c0_8 = arith.constant 0 : index
    %8 = vector.load %arg4[%c0_7, %c0_8] : memref<128x128xf32, #tpu.memory_space<vmem>>, vector<128x128xf32>
    %cst_9 = arith.constant dense<0.000000e+00> : vector<16x128xf32>
    %9 = tpu.matmul %5, %8, %cst_9 {dimension_numbers = #tpu.dot_dimension_numbers<[1], [0], [0], [1], [0, 0, 1, 1], [], []>} : vector<16x128xf32>, vector<128x128xf32>, vector<16x128xf32> -> vector<16x128xf32>
    %10 = arith.mulf %7, %7 : vector<16x128xf32>
    %11 = arith.mulf %9, %9 : vector<16x128xf32>
    %12 = arith.mulf %7, %9 : vector<16x128xf32>
    %13 = tpu.concatenate %10, %11, %12 in 1 : vector<16x128xf32>, vector<16x128xf32>, vector<16x128xf32> -> vector<16x384xf32>
    %c0_10 = arith.constant 0 : index
    %c0_11 = arith.constant 0 : index
    %14 = vector.load %arg5[%c0_10, %c0_11] : memref<16x16xf32, #tpu.memory_space<vmem>>, vector<16x16xf32>
    %cst_12 = arith.constant dense<0.000000e+00> : vector<16x384xf32>
    %15 = tpu.matmul %14, %13, %cst_12 {dimension_numbers = #tpu.dot_dimension_numbers<[1], [0], [0], [1], [0, 0, 1, 1], [], []>} : vector<16x16xf32>, vector<16x384xf32>, vector<16x384xf32> -> vector<16x384xf32>
    %c0_13 = arith.constant 0 : index
    %c0_14 = arith.constant 0 : index
    %16 = vector.load %arg6[%c0_13, %c0_14] : memref<128x128xf32, #tpu.memory_space<vmem>>, vector<128x128xf32>
    %17 = vector.extract_strided_slice %15 {offsets = [0, 0], sizes = [16, 128], strides = [1, 1]} : vector<16x384xf32> to vector<16x128xf32>
    %cst_15 = arith.constant dense<0.000000e+00> : vector<16x128xf32>
    %18 = tpu.matmul %17, %16, %cst_15 {dimension_numbers = #tpu.dot_dimension_numbers<[1], [0], [0], [1], [0, 0, 1, 1], [], []>} : vector<16x128xf32>, vector<128x128xf32>, vector<16x128xf32> -> vector<16x128xf32>
    %19 = vector.extract_strided_slice %15 {offsets = [0, 128], sizes = [16, 128], strides = [1, 1]} : vector<16x384xf32> to vector<16x128xf32>
    %cst_16 = arith.constant dense<0.000000e+00> : vector<16x128xf32>
    %20 = tpu.matmul %19, %16, %cst_16 {dimension_numbers = #tpu.dot_dimension_numbers<[1], [0], [0], [1], [0, 0, 1, 1], [], []>} : vector<16x128xf32>, vector<128x128xf32>, vector<16x128xf32> -> vector<16x128xf32>
    %21 = vector.extract_strided_slice %15 {offsets = [0, 256], sizes = [16, 128], strides = [1, 1]} : vector<16x384xf32> to vector<16x128xf32>
    %cst_17 = arith.constant dense<0.000000e+00> : vector<16x128xf32>
    %22 = tpu.matmul %21, %16, %cst_17 {dimension_numbers = #tpu.dot_dimension_numbers<[1], [0], [0], [1], [0, 0, 1, 1], [], []>} : vector<16x128xf32>, vector<128x128xf32>, vector<16x128xf32> -> vector<16x128xf32>
    %23 = arith.addf %18, %20 : vector<16x128xf32>
    %24 = arith.mulf %18, %20 : vector<16x128xf32>
    %25 = arith.mulf %22, %22 : vector<16x128xf32>
    %26 = arith.subf %24, %25 : vector<16x128xf32>
    %27 = arith.mulf %23, %23 : vector<16x128xf32>
    %cst_18 = arith.constant 4.000000e+00 : f32
    %28 = vector.broadcast %cst_18 : f32 to vector<16x128xf32>
    %29 = arith.mulf %28, %26 : vector<16x128xf32>
    %30 = arith.subf %27, %29 : vector<16x128xf32>
    %31 = math.absf %30 : vector<16x128xf32>
    %32 = math.sqrt %31 : vector<16x128xf32>
    %33 = arith.subf %23, %32 : vector<16x128xf32>
    %cst_19 = arith.constant 5.000000e-01 : f32
    %34 = vector.broadcast %cst_19 : f32 to vector<16x128xf32>
    %35 = arith.mulf %34, %33 : vector<16x128xf32>
    %c0_20 = arith.constant 0 : index
    %c0_21 = arith.constant 0 : index
    %c0_22 = arith.constant 0 : index
    %36 = vector.load %arg7[%c0_20, %c0_21, %c0_22] : memref<1x16x128xf32, #tpu.memory_space<vmem>>, vector<1x16x128xf32>
    %37 = vector.shape_cast %36 : vector<1x16x128xf32> to vector<16x128xf32>
    %38 = vector.shape_cast %35 : vector<16x128xf32> to vector<1x16x128xf32>
    tpu.vector_store %arg7[%c0_20, %c0_21, %c0_22], %38 {strides = array<i32>} : memref<1x16x128xf32, #tpu.memory_space<vmem>>, vector<1x16x128xf32>,
    return
  }
  func.func @transform_0(%arg0: i32) -> (i32, i32, i32) {
    %c0_i32 = arith.constant 0 : i32
    %c0_i32_0 = arith.constant 0 : i32
    %c0_i32_1 = arith.constant 0 : i32
    return %arg0, %c0_i32, %c0_i32_0 : i32, i32, i32
  }
  func.func @transform_1(%arg0: i32) -> (i32, i32) {
    %c0_i32 = arith.constant 0 : i32
    %c0_i32_0 = arith.constant 0 : i32
    %c0_i32_1 = arith.constant 0 : i32
    return %c0_i32, %c0_i32_0 : i32, i32
  }
  func.func @transform_2(%arg0: i32) -> (i32, i32) {
    %c0_i32 = arith.constant 0 : i32
    %c0_i32_0 = arith.constant 0 : i32
    %c0_i32_1 = arith.constant 0 : i32
    return %c0_i32, %c0_i32_0 : i32, i32
  }
  func.func @transform_3(%arg0: i32) -> (i32, i32) {
    %c0_i32 = arith.constant 0 : i32
    %c0_i32_0 = arith.constant 0 : i32
    %c0_i32_1 = arith.constant 0 : i32
    return %c0_i32, %c0_i32_0 : i32, i32
  }
  func.func @transform_4(%arg0: i32) -> (i32, i32) {
    %c0_i32 = arith.constant 0 : i32
    %c0_i32_0 = arith.constant 0 : i32
    %c0_i32_1 = arith.constant 0 : i32
    return %c0_i32, %c0_i32_0 : i32, i32
  }
  func.func @transform_5(%arg0: i32) -> (i32, i32) {
    %c0_i32 = arith.constant 0 : i32
    %c0_i32_0 = arith.constant 0 : i32
    %c0_i32_1 = arith.constant 0 : i32
    return %c0_i32, %c0_i32_0 : i32, i32
  }
  func.func @transform_6(%arg0: i32) -> (i32, i32, i32) {
    %c0_i32 = arith.constant 0 : i32
    %c0_i32_0 = arith.constant 0 : i32
    %c0_i32_1 = arith.constant 0 : i32
    return %arg0, %c0_i32, %c0_i32_0 : i32, i32, i32
  }
}

</mosaic_0001>

<llo_original>
// kernel: tpu_custom_call.1
$region0: #{tpu_custom_call.1}
  #allocation0 [shape = 'u32[]', space=smem, size = 0x4, offset = 0x4, fixed_abs, tag = 'smem constant byte address 0x4 - core index']
  #allocation1 [shape = 'u32[144,128]{1,0:T(1,128)}', space=vmem, size = 0x12000, scoped, tag = 'internal scratch']
  %s0 = inlined_call_operand.vmem [shape: f32[1,16,128], index: 0, kind: input, shape index: {}]
  %s1 = inlined_call_operand.vmem [shape: f32[32,16], index: 1, kind: input, shape index: {}]
  %s2 = inlined_call_operand.hbm [shape: f32[128,128], index: 2, kind: input, shape index: {}]
  %s3 = inlined_call_operand.hbm [shape: f32[128,128], index: 3, kind: input, shape index: {}]
  %s4 = inlined_call_operand.vmem [shape: f32[16,16], index: 4, kind: input, shape index: {}]
  %s5 = inlined_call_operand.hbm [shape: f32[128,128], index: 5, kind: input, shape index: {}]
  %s6 = inlined_call_operand.hbm [shape: f32[1,16,128], index: 6, kind: output, shape index: {}]
  %s7 = sld [smem:[#allocation0]]
  $region46: #{tpu_custom_call.1} parent=0
    _
  %s9 = ssub.s32 1, %s7
  %s10 = scalar_select 0, %s9, %s7
  $region1: #{tpu_custom_call.1} parent=0
    #allocation2 [shape = 'u8[65536]{0}', space=vmem, size = 0x10000, scoped, tag = 'input window, operand 2, single buffered']
    #allocation3 [shape = 's32[1]{0}', space=sflag, size = 0x4, scoped, tag = 'scoped memory for tpu_custom_call.1']
    #allocation4 [shape = 's32[1]{0}', space=sflag, size = 0x4, scoped, tag = 'scoped memory for tpu_custom_call.1']
    #allocation5 [shape = 'u8[65536]{0}', space=vmem, size = 0x10000, scoped, tag = 'input window, operand 3, single buffered']
    #allocation6 [shape = 's32[1]{0}', space=sflag, size = 0x4, scoped, tag = 'scoped memory for tpu_custom_call.1']
    #allocation7 [shape = 'u8[65536]{0}', space=vmem, size = 0x10000, scoped, tag = 'input window, operand 5, single buffered']
    #allocation8 [shape = 'u8[8192]{0}', space=vmem, size = 0x2000, scoped, tag = 'output window, operand 0, single buffered']
    %11 = vsyncpa [#allocation3], 0
    %12 = vsyncpa [#allocation6], 0
    %13 = vsyncpa [#allocation4], 0
    // Predicated region
    $region2: #{tpu_custom_call.1} parent=1 // pred_check
      _
    $region3: #{tpu_custom_call.1} parent=1 // pred_check_branch
      %15 = sbr.rel (0) target = $region5
    $region4: #{tpu_custom_call.1} parent=1 // pred_region
      _
    $region5: #{tpu_custom_call.1} parent=1 // pred_fallthru
      _
    // Predicated region
    $region6: #{tpu_custom_call.1} parent=1 // pred_check
      _
    $region7: #{tpu_custom_call.1} parent=1 // pred_check_branch
      %17 = sbr.rel (0) target = $region9
    $region8: #{tpu_custom_call.1} parent=1 // pred_region
      _
    $region9: #{tpu_custom_call.1} parent=1 // pred_fallthru
      _
    // Predicated region
    $region10: #{tpu_custom_call.1} parent=1 // pred_check
      _
    $region11: #{tpu_custom_call.1} parent=1 // pred_check_branch
      %19 = sbr.rel (0) target = $region13
    $region12: #{tpu_custom_call.1} parent=1 // pred_region
      %s21 = ssub.s32 2048, 2048
      %22 = vsyncadd [#allocation3], %s21
      %s23 = sshll.u32 [#allocation2], 4
      %s24 = int_to_ptr.vmem [resolvable:$true] %s23
      %29 = dma.hbm_to_vmem [thread:$0]  %s2, 2048, %s24, [#allocation3], 128, 128, 8
    $region13: #{tpu_custom_call.1} parent=1 // pred_fallthru
      _
    // Predicated region
    $region14: #{tpu_custom_call.1} parent=1 // pred_check
      _
    $region15: #{tpu_custom_call.1} parent=1 // pred_check_branch
      %31 = sbr.rel (0) target = $region17
    $region16: #{tpu_custom_call.1} parent=1 // pred_region
      %s33 = ssub.s32 2048, 2048
      %34 = vsyncadd [#allocation6], %s33
      %s35 = sshll.u32 [#allocation5], 4
      %s36 = int_to_ptr.vmem [resolvable:$true] %s35
      %41 = dma.hbm_to_vmem [thread:$0]  %s3, 2048, %s36, [#allocation6], 128, 128, 8
    $region17: #{tpu_custom_call.1} parent=1 // pred_fallthru
      _
    // Predicated region
    $region18: #{tpu_custom_call.1} parent=1 // pred_check
      _
    $region19: #{tpu_custom_call.1} parent=1 // pred_check_branch
      %43 = sbr.rel (0) target = $region21
    $region20: #{tpu_custom_call.1} parent=1 // pred_region
      _
    $region21: #{tpu_custom_call.1} parent=1 // pred_fallthru
      _
    // Predicated region
    $region22: #{tpu_custom_call.1} parent=1 // pred_check
      _
    $region23: #{tpu_custom_call.1} parent=1 // pred_check_branch
      %45 = sbr.rel (0) target = $region25
    $region24: #{tpu_custom_call.1} parent=1 // pred_region
      %s47 = ssub.s32 2048, 2048
      %48 = vsyncadd [#allocation6], %s47
      %s49 = sshll.u32 [#allocation7], 4
      %s50 = int_to_ptr.vmem [resolvable:$true] %s49
      %55 = dma.hbm_to_vmem [thread:$0]  %s5, 2048, %s50, [#allocation6], 128, 128, 8
    $region25: #{tpu_custom_call.1} parent=1 // pred_fallthru
      _
    // Predicated region
    $region26: #{tpu_custom_call.1} parent=1 // pred_check
      _
    $region27: #{tpu_custom_call.1} parent=1 // pred_check_branch
      %57 = sbr.rel (0) target = $region29
    $region28: #{tpu_custom_call.1} parent=1 // pred_region
      %58 = dma.done [#allocation3], 2048
    $region29: #{tpu_custom_call.1} parent=1 // pred_fallthru
      _
    // Predicated region
    $region30: #{tpu_custom_call.1} parent=1 // pred_check
      _
    $region31: #{tpu_custom_call.1} parent=1 // pred_check_branch
      %60 = sbr.rel (0) target = $region33
    $region32: #{tpu_custom_call.1} parent=1 // pred_region
      %61 = dma.done [#allocation6], 2048
    $region33: #{tpu_custom_call.1} parent=1 // pred_fallthru
      _
    // Predicated region
    $region34: #{tpu_custom_call.1} parent=1 // pred_check
      _
    $region35: #{tpu_custom_call.1} parent=1 // pred_check_branch
      %63 = sbr.rel (0) target = $region37
    $region36: #{tpu_custom_call.1} parent=1 // pred_region
      %64 = dma.done [#allocation6], 2048
    $region37: #{tpu_custom_call.1} parent=1 // pred_fallthru
      _
    %v65 = vld [vmem:[%s0] sm:$0xff]
    %v66 = vld [vmem:[%s0 + $0x8] sm:$0xff]
    %v67 = vld [vmem:[%s1] sm:$0xff]
    %v68 = vld [vmem:[%s1 + $0x8] sm:$0xff]
    %v69 = vld [vmem:[%s1 + $0x10] sm:$0xff]
    %v70 = vld [vmem:[%s1 + $0x18] sm:$0xff]
    %vm71 = vcmask 130048
    %v73 = vsel %vm71, %v67, 0
    %v76 = vsel %vm71, %v68, 0
    %v79 = vsel %vm71, %v69, 0
    %v82 = vsel %vm71, %v70, 0
    %84 = vmatprep.subr.mxu0 0.0
    %85 = vmatpush1.msra.mxu0 %v65
    %86 = vmatprep.subr.mxu0 0.0
    %87 = vmatpush1.msra.mxu0 %v66
    %88 = vmatprep.subr.mxu0 0.0
    %89 = vmatpush1.msra.mxu0 0.0
    %90 = vmatprep.subr.mxu0 0.0
    %91 = vmatpush1.msra.mxu0 0.0
    %92 = vmatprep.subr.mxu0 0.0
    %93 = vmatpush1.msra.mxu0 0.0
    %94 = vmatprep.subr.mxu0 0.0
    %95 = vmatpush1.msra.mxu0 0.0
    %96 = vmatprep.subr.mxu0 0.0
    %97 = vmatpush1.msra.mxu0 0.0
    %98 = vmatprep.subr.mxu0 0.0
    %99 = vmatpush1.msra.mxu0 0.0
    %100 = vmatprep.subr.mxu0 0.0
    %101 = vmatpush1.msra.mxu0 0.0
    %102 = vmatprep.subr.mxu0 0.0
    %103 = vmatpush1.msra.mxu0 0.0
    %104 = vmatprep.subr.mxu0 0.0
    %105 = vmatpush1.msra.mxu0 0.0
    %106 = vmatprep.subr.mxu0 0.0
    %107 = vmatpush1.msra.mxu0 0.0
    %108 = vmatprep.subr.mxu0 0.0
    %109 = vmatpush1.msra.mxu0 0.0
    %110 = vmatprep.subr.mxu0 0.0
    %111 = vmatpush1.msra.mxu0 0.0
    %112 = vmatprep.subr.mxu0 0.0
    %113 = vmatpush1.msra.mxu0 0.0
    %114 = vmatprep.subr.mxu0 0.0
    %115 = vmatpush1.msra.mxu0 0.0
    %116 = vmatprep.subr.mxu0 0.0
    %117 = vmatpush1.msra.mxu0 0.0
    %118 = vmatprep.subr.mxu0 0.0
    %119 = vmatpush1.msra.mxu0 0.0
    %120 = vmatprep.subr.mxu0 0.0
    %121 = vmatpush1.msra.mxu0 0.0
    %122 = vmatprep.subr.mxu0 0.0
    %123 = vmatpush1.msra.mxu0 0.0
    %124 = vmatprep.subr.mxu0 0.0
    %125 = vmatpush1.msra.mxu0 0.0
    %126 = vmatprep.subr.mxu0 0.0
    %127 = vmatpush1.msra.mxu0 0.0
    %128 = vmatprep.subr.mxu0 0.0
    %129 = vmatpush1.msra.mxu0 0.0
    %130 = vmatprep.subr.mxu0 0.0
    %131 = vmatpush1.msra.mxu0 0.0
    %132 = vmatprep.subr.mxu0 0.0
    %133 = vmatpush1.msra.mxu0 0.0
    %134 = vmatprep.subr.mxu0 0.0
    %135 = vmatpush1.msra.mxu0 0.0
    %136 = vmatprep.subr.mxu0 0.0
    %137 = vmatpush1.msra.mxu0 0.0
    %138 = vmatprep.subr.mxu0 0.0
    %139 = vmatpush1.msra.mxu0 0.0
    %140 = vmatprep.subr.mxu0 0.0
    %141 = vmatpush1.msra.mxu0 0.0
    %142 = vmatprep.subr.mxu0 0.0
    %143 = vmatpush1.msra.mxu0 0.0
    %144 = vmatprep.subr.mxu0 0.0
    %145 = vmatpush1.msra.mxu0 0.0
    %146 = vmatprep.subr.mxu0 0.0
    %147 = vmatpush1.msra.mxu0 0.0
    %148 = vmatprep.mubr.f32.mxu0 0.0
    %149 = vmatmul.mubr.f32.gmra.mrb[0].mxu0 %v73
    %v150 = vpop.f32.mrb[0].mxu0
    %v151 = vadd.f32 0.0, %v150
    %v152 = vpop.f32.mrb[0].mxu0
    %153 = vmatprep.mubr.f32.mxu0 0.0
    %154 = vmatmul.mubr.f32.gmra.mrb[0].mxu0 %v76
    %v155 = vpop.f32.mrb[0].mxu0
    %v156 = vadd.f32 0.0, %v155
    %v157 = vpop.f32.mrb[0].mxu0
    %158 = vmatprep.mubr.f32.mxu0 0.0
    %159 = vmatmul.mubr.f32.gmra.mrb[0].mxu0 %v79
    %v160 = vpop.f32.mrb[0].mxu0
    %v161 = vadd.f32 0.0, %v160
    %v162 = vpop.f32.mrb[0].mxu0
    %163 = vmatprep.mubr.f32.mxu0 0.0
    %164 = vmatmul.mubr.f32.gmra.mrb[0].mxu0 %v82
    %v165 = vpop.f32.mrb[0].mxu0
    %v166 = vadd.f32 0.0, %v165
    %v167 = vpop.f32.mrb[0].mxu0
    %168 = vdwg.mxu0
    %v169 = vld [vmem:[#allocation2] sm:$0xff]
    %v170 = vld [vmem:[#allocation2 + $0x8] sm:$0xff]
    %v171 = vld [vmem:[#allocation2 + $0x10] sm:$0xff]
    %v172 = vld [vmem:[#allocation2 + $0x18] sm:$0xff]
    %v173 = vld [vmem:[#allocation2 + $0x20] sm:$0xff]
    %v174 = vld [vmem:[#allocation2 + $0x28] sm:$0xff]
    %v175 = vld [vmem:[#allocation2 + $0x30] sm:$0xff]
    %v176 = vld [vmem:[#allocation2 + $0x38] sm:$0xff]
    %v177 = vld [vmem:[#allocation2 + $0x40] sm:$0xff]
    %v178 = vld [vmem:[#allocation2 + $0x48] sm:$0xff]
    %v179 = vld [vmem:[#allocation2 + $0x50] sm:$0xff]
    %v180 = vld [vmem:[#allocation2 + $0x58] sm:$0xff]
    %v181 = vld [vmem:[#allocation2 + $0x60] sm:$0xff]
    %v182 = vld [vmem:[#allocation2 + $0x68] sm:$0xff]
    %v183 = vld [vmem:[#allocation2 + $0x70] sm:$0xff]
    %v184 = vld [vmem:[#allocation2 + $0x78] sm:$0xff]
    %185 = vmatprep.subr.mxu0 0.0
    %186 = vmatpush1.msra.mxu0 %v169
    %187 = vmatprep.subr.mxu0 0.0
    %188 = vmatpush1.msra.mxu0 %v170
    %189 = vmatprep.subr.mxu0 0.0
    %190 = vmatpush1.msra.mxu0 %v171
    %191 = vmatprep.subr.mxu0 0.0
    %192 = vmatpush1.msra.mxu0 %v172
    %193 = vmatprep.subr.mxu0 0.0
    %194 = vmatpush1.msra.mxu0 %v173
    %195 = vmatprep.subr.mxu0 0.0
    %196 = vmatpush1.msra.mxu0 %v174
    %197 = vmatprep.subr.mxu0 0.0
    %198 = vmatpush1.msra.mxu0 %v175
    %199 = vmatprep.subr.mxu0 0.0
    %200 = vmatpush1.msra.mxu0 %v176
    %201 = vmatprep.subr.mxu0 0.0
    %202 = vmatpush1.msra.mxu0 %v177
    %203 = vmatprep.subr.mxu0 0.0
    %204 = vmatpush1.msra.mxu0 %v178
    %205 = vmatprep.subr.mxu0 0.0
    %206 = vmatpush1.msra.mxu0 %v179
    %207 = vmatprep.subr.mxu0 0.0
    %208 = vmatpush1.msra.mxu0 %v180
    %209 = vmatprep.subr.mxu0 0.0
    %210 = vmatpush1.msra.mxu0 %v181
    %211 = vmatprep.subr.mxu0 0.0
    %212 = vmatpush1.msra.mxu0 %v182
    %213 = vmatprep.subr.mxu0 0.0
    %214 = vmatpush1.msra.mxu0 %v183
    %215 = vmatprep.subr.mxu0 0.0
    %216 = vmatpush1.msra.mxu0 %v184
    %217 = vmatprep.subr.mxu0 0.0
    %218 = vmatpush1.msra.mxu0 0.0
    %219 = vmatprep.subr.mxu0 0.0
    %220 = vmatpush1.msra.mxu0 0.0
    %221 = vmatprep.subr.mxu0 0.0
    %222 = vmatpush1.msra.mxu0 0.0
    %223 = vmatprep.subr.mxu0 0.0
    %224 = vmatpush1.msra.mxu0 0.0
    %225 = vmatprep.subr.mxu0 0.0
    %226 = vmatpush1.msra.mxu0 0.0
    %227 = vmatprep.subr.mxu0 0.0
    %228 = vmatpush1.msra.mxu0 0.0
    %229 = vmatprep.subr.mxu0 0.0
    %230 = vmatpush1.msra.mxu0 0.0
    %231 = vmatprep.subr.mxu0 0.0
    %232 = vmatpush1.msra.mxu0 0.0
    %233 = vmatprep.subr.mxu0 0.0
    %234 = vmatpush1.msra.mxu0 0.0
    %235 = vmatprep.subr.mxu0 0.0
    %236 = vmatpush1.msra.mxu0 0.0
    %237 = vmatprep.subr.mxu0 0.0
    %238 = vmatpush1.msra.mxu0 0.0
    %239 = vmatprep.subr.mxu0 0.0
    %240 = vmatpush1.msra.mxu0 0.0
    %241 = vmatprep.subr.mxu0 0.0
    %242 = vmatpush1.msra.mxu0 0.0
    %243 = vmatprep.subr.mxu0 0.0
    %244 = vmatpush1.msra.mxu0 0.0
    %245 = vmatprep.subr.mxu0 0.0
    %246 = vmatpush1.msra.mxu0 0.0
    %247 = vmatprep.subr.mxu0 0.0
    %248 = vmatpush1.msra.mxu0 0.0
    %249 = vmatprep.mubr.f32.mxu0 0.0
    %250 = vmatmul.mubr.f32.gmra.mrb[0].mxu0 %v151
    %v251 = vpop.f32.mrb[0].mxu0
    %v252 = vadd.f32 0.0, %v251
    %v253 = vpop.f32.mrb[0].mxu0
    %254 = vmatprep.mubr.f32.mxu0 0.0
    %255 = vmatmul.mubr.f32.gmra.mrb[0].mxu0 %v156
    %v256 = vpop.f32.mrb[0].mxu0
    %v257 = vadd.f32 0.0, %v256
    %v258 = vpop.f32.mrb[0].mxu0
    %259 = vdwg.mxu0
    %v260 = vld [vmem:[#allocation5] sm:$0xff]
    %v261 = vld [vmem:[#allocation5 + $0x8] sm:$0xff]
    %v262 = vld [vmem:[#allocation5 + $0x10] sm:$0xff]
    %v263 = vld [vmem:[#allocation5 + $0x18] sm:$0xff]
    %v264 = vld [vmem:[#allocation5 + $0x20] sm:$0xff]
    %v265 = vld [vmem:[#allocation5 + $0x28] sm:$0xff]
    %v266 = vld [vmem:[#allocation5 + $0x30] sm:$0xff]
    %v267 = vld [vmem:[#allocation5 + $0x38] sm:$0xff]
    %v268 = vld [vmem:[#allocation5 + $0x40] sm:$0xff]
    %v269 = vld [vmem:[#allocation5 + $0x48] sm:$0xff]
    %v270 = vld [vmem:[#allocation5 + $0x50] sm:$0xff]
    %v271 = vld [vmem:[#allocation5 + $0x58] sm:$0xff]
    %v272 = vld [vmem:[#allocation5 + $0x60] sm:$0xff]
    %v273 = vld [vmem:[#allocation5 + $0x68] sm:$0xff]
    %v274 = vld [vmem:[#allocation5 + $0x70] sm:$0xff]
    %v275 = vld [vmem:[#allocation5 + $0x78] sm:$0xff]
    %276 = vmatprep.subr.mxu0 0.0
    %277 = vmatpush1.msra.mxu0 %v260
    %278 = vmatprep.subr.mxu0 0.0
    %279 = vmatpush1.msra.mxu0 %v261
    %280 = vmatprep.subr.mxu0 0.0
    %281 = vmatpush1.msra.mxu0 %v262
    %282 = vmatprep.subr.mxu0 0.0
    %283 = vmatpush1.msra.mxu0 %v263
    %284 = vmatprep.subr.mxu0 0.0
    %285 = vmatpush1.msra.mxu0 %v264
    %286 = vmatprep.subr.mxu0 0.0
    %287 = vmatpush1.msra.mxu0 %v265
    %288 = vmatprep.subr.mxu0 0.0
    %289 = vmatpush1.msra.mxu0 %v266
    %290 = vmatprep.subr.mxu0 0.0
    %291 = vmatpush1.msra.mxu0 %v267
    %292 = vmatprep.subr.mxu0 0.0
    %293 = vmatpush1.msra.mxu0 %v268
    %294 = vmatprep.subr.mxu0 0.0
    %295 = vmatpush1.msra.mxu0 %v269
    %296 = vmatprep.subr.mxu0 0.0
    %297 = vmatpush1.msra.mxu0 %v270
    %298 = vmatprep.subr.mxu0 0.0
    %299 = vmatpush1.msra.mxu0 %v271
    %300 = vmatprep.subr.mxu0 0.0
    %301 = vmatpush1.msra.mxu0 %v272
    %302 = vmatprep.subr.mxu0 0.0
    %303 = vmatpush1.msra.mxu0 %v273
    %304 = vmatprep.subr.mxu0 0.0
    %305 = vmatpush1.msra.mxu0 %v274
    %306 = vmatprep.subr.mxu0 0.0
    %307 = vmatpush1.msra.mxu0 %v275
    %308 = vmatprep.subr.mxu0 0.0
    %309 = vmatpush1.msra.mxu0 0.0
    %310 = vmatprep.subr.mxu0 0.0
    %311 = vmatpush1.msra.mxu0 0.0
    %312 = vmatprep.subr.mxu0 0.0
    %313 = vmatpush1.msra.mxu0 0.0
    %314 = vmatprep.subr.mxu0 0.0
    %315 = vmatpush1.msra.mxu0 0.0
    %316 = vmatprep.subr.mxu0 0.0
    %317 = vmatpush1.msra.mxu0 0.0
    %318 = vmatprep.subr.mxu0 0.0
    %319 = vmatpush1.msra.mxu0 0.0
    %320 = vmatprep.subr.mxu0 0.0
    %321 = vmatpush1.msra.mxu0 0.0
    %322 = vmatprep.subr.mxu0 0.0
    %323 = vmatpush1.msra.mxu0 0.0
    %324 = vmatprep.subr.mxu0 0.0
    %325 = vmatpush1.msra.mxu0 0.0
    %326 = vmatprep.subr.mxu0 0.0
    %327 = vmatpush1.msra.mxu0 0.0
    %328 = vmatprep.subr.mxu0 0.0
    %329 = vmatpush1.msra.mxu0 0.0
    %330 = vmatprep.subr.mxu0 0.0
    %331 = vmatpush1.msra.mxu0 0.0
    %332 = vmatprep.subr.mxu0 0.0
    %333 = vmatpush1.msra.mxu0 0.0
    %334 = vmatprep.subr.mxu0 0.0
    %335 = vmatpush1.msra.mxu0 0.0
    %336 = vmatprep.subr.mxu0 0.0
    %337 = vmatpush1.msra.mxu0 0.0
    %338 = vmatprep.subr.mxu0 0.0
    %339 = vmatpush1.msra.mxu0 0.0
    %340 = vmatprep.mubr.f32.mxu0 0.0
    %341 = vmatmul.mubr.f32.gmra.mrb[0].mxu0 %v161
    %v342 = vpop.f32.mrb[0].mxu0
    %v343 = vadd.f32 0.0, %v342
    %v344 = vpop.f32.mrb[0].mxu0
    %345 = vmatprep.mubr.f32.mxu0 0.0
    %346 = vmatmul.mubr.f32.gmra.mrb[0].mxu0 %v166
    %v347 = vpop.f32.mrb[0].mxu0
    %v348 = vadd.f32 0.0, %v347
    %v349 = vpop.f32.mrb[0].mxu0
    %350 = vdwg.mxu0
    %v351 = vmul.f32 %v252, %v252
    %v352 = vmul.f32 %v257, %v257
    %v353 = vmul.f32 %v343, %v343
    %v354 = vmul.f32 %v348, %v348
    %v355 = vmul.f32 %v252, %v343
    %v356 = vmul.f32 %v257, %v348
    %v357 = vld [vmem:[%s4] sm:$0xff]
    %v358 = vld [vmem:[%s4 + $0x8] sm:$0xff]
    %v360 = vsel %vm71, %v357, 0
    %v363 = vsel %vm71, %v358, 0
    %365 = vmatprep.subr.mxu0 %v353
    %366 = vmatpush1.msra.mxu0 %v351
    %367 = vmatprep.subr.mxu0 %v354
    %368 = vmatpush1.msra.mxu0 %v352
    %369 = vmatprep.subr.mxu0 0.0
    %370 = vmatpush1.msra.mxu0 0.0
    %371 = vmatprep.subr.mxu0 0.0
    %372 = vmatpush1.msra.mxu0 0.0
    %373 = vmatprep.subr.mxu0 0.0
    %374 = vmatpush1.msra.mxu0 0.0
    %375 = vmatprep.subr.mxu0 0.0
    %376 = vmatpush1.msra.mxu0 0.0
    %377 = vmatprep.subr.mxu0 0.0
    %378 = vmatpush1.msra.mxu0 0.0
    %379 = vmatprep.subr.mxu0 0.0
    %380 = vmatpush1.msra.mxu0 0.0
    %381 = vmatprep.subr.mxu0 0.0
    %382 = vmatpush1.msra.mxu0 0.0
    %383 = vmatprep.subr.mxu0 0.0
    %384 = vmatpush1.msra.mxu0 0.0
    %385 = vmatprep.subr.mxu0 0.0
    %386 = vmatpush1.msra.mxu0 0.0
    %387 = vmatprep.subr.mxu0 0.0
    %388 = vmatpush1.msra.mxu0 0.0
    %389 = vmatprep.subr.mxu0 0.0
    %390 = vmatpush1.msra.mxu0 0.0
    %391 = vmatprep.subr.mxu0 0.0
    %392 = vmatpush1.msra.mxu0 0.0
    %393 = vmatprep.subr.mxu0 0.0
    %394 = vmatpush1.msra.mxu0 0.0
    %395 = vmatprep.subr.mxu0 0.0
    %396 = vmatpush1.msra.mxu0 0.0
    %397 = vmatprep.subr.mxu0 0.0
    %398 = vmatpush1.msra.mxu0 0.0
    %399 = vmatprep.subr.mxu0 0.0
    %400 = vmatpush1.msra.mxu0 0.0
    %401 = vmatprep.subr.mxu0 0.0
    %402 = vmatpush1.msra.mxu0 0.0
    %403 = vmatprep.subr.mxu0 0.0
    %404 = vmatpush1.msra.mxu0 0.0
    %405 = vmatprep.subr.mxu0 0.0
    %406 = vmatpush1.msra.mxu0 0.0
    %407 = vmatprep.subr.mxu0 0.0
    %408 = vmatpush1.msra.mxu0 0.0
    %409 = vmatprep.subr.mxu0 0.0
    %410 = vmatpush1.msra.mxu0 0.0
    %411 = vmatprep.subr.mxu0 0.0
    %412 = vmatpush1.msra.mxu0 0.0
    %413 = vmatprep.subr.mxu0 0.0
    %414 = vmatpush1.msra.mxu0 0.0
    %415 = vmatprep.subr.mxu0 0.0
    %416 = vmatpush1.msra.mxu0 0.0
    %417 = vmatprep.subr.mxu0 0.0
    %418 = vmatpush1.msra.mxu0 0.0
    %419 = vmatprep.subr.mxu0 0.0
    %420 = vmatpush1.msra.mxu0 0.0
    %421 = vmatprep.subr.mxu0 0.0
    %422 = vmatpush1.msra.mxu0 0.0
    %423 = vmatprep.subr.mxu0 0.0
    %424 = vmatpush1.msra.mxu0 0.0
    %425 = vmatprep.subr.mxu0 0.0
    %426 = vmatpush1.msra.mxu0 0.0
    %427 = vmatprep.subr.mxu0 0.0
    %428 = vmatpush1.msra.mxu0 0.0
    %429 = vmatprep.mubr.f32.mxu0 0.0
    %430 = vmatmul.mubr.f32.gmra.mrb[0].mxu0 %v360
    %v431 = vpop.f32.mrb[0].mxu0
    %v432 = vadd.f32 0.0, %v431
    %v433 = vpop.f32.mrb[0].mxu0
    %v434 = vadd.f32 0.0, %v433
    %435 = vmatprep.mubr.f32.mxu0 0.0
    %436 = vmatmul.mubr.f32.gmra.mrb[0].mxu0 %v363
    %v437 = vpop.f32.mrb[0].mxu0
    %v438 = vadd.f32 0.0, %v437
    %v439 = vpop.f32.mrb[0].mxu0
    %v440 = vadd.f32 0.0, %v439
    %441 = vdwg.mxu0
    %442 = vmatprep.subr.mxu0 0.0
    %443 = vmatpush1.msra.mxu0 %v355
    %444 = vmatprep.subr.mxu0 0.0
    %445 = vmatpush1.msra.mxu0 %v356
    %446 = vmatprep.subr.mxu0 0.0
    %447 = vmatpush1.msra.mxu0 0.0
    %448 = vmatprep.subr.mxu0 0.0
    %449 = vmatpush1.msra.mxu0 0.0
    %450 = vmatprep.subr.mxu0 0.0
    %451 = vmatpush1.msra.mxu0 0.0
    %452 = vmatprep.subr.mxu0 0.0
    %453 = vmatpush1.msra.mxu0 0.0
    %454 = vmatprep.subr.mxu0 0.0
    %455 = vmatpush1.msra.mxu0 0.0
    %456 = vmatprep.subr.mxu0 0.0
    %457 = vmatpush1.msra.mxu0 0.0
    %458 = vmatprep.subr.mxu0 0.0
    %459 = vmatpush1.msra.mxu0 0.0
    %460 = vmatprep.subr.mxu0 0.0
    %461 = vmatpush1.msra.mxu0 0.0
    %462 = vmatprep.subr.mxu0 0.0
    %463 = vmatpush1.msra.mxu0 0.0
    %464 = vmatprep.subr.mxu0 0.0
    %465 = vmatpush1.msra.mxu0 0.0
    %466 = vmatprep.subr.mxu0 0.0
    %467 = vmatpush1.msra.mxu0 0.0
    %468 = vmatprep.subr.mxu0 0.0
    %469 = vmatpush1.msra.mxu0 0.0
    %470 = vmatprep.subr.mxu0 0.0
    %471 = vmatpush1.msra.mxu0 0.0
    %472 = vmatprep.subr.mxu0 0.0
    %473 = vmatpush1.msra.mxu0 0.0
    %474 = vmatprep.subr.mxu0 0.0
    %475 = vmatpush1.msra.mxu0 0.0
    %476 = vmatprep.subr.mxu0 0.0
    %477 = vmatpush1.msra.mxu0 0.0
    %478 = vmatprep.subr.mxu0 0.0
    %479 = vmatpush1.msra.mxu0 0.0
    %480 = vmatprep.subr.mxu0 0.0
    %481 = vmatpush1.msra.mxu0 0.0
    %482 = vmatprep.subr.mxu0 0.0
    %483 = vmatpush1.msra.mxu0 0.0
    %484 = vmatprep.subr.mxu0 0.0
    %485 = vmatpush1.msra.mxu0 0.0
    %486 = vmatprep.subr.mxu0 0.0
    %487 = vmatpush1.msra.mxu0 0.0
    %488 = vmatprep.subr.mxu0 0.0
    %489 = vmatpush1.msra.mxu0 0.0
    %490 = vmatprep.subr.mxu0 0.0
    %491 = vmatpush1.msra.mxu0 0.0
    %492 = vmatprep.subr.mxu0 0.0
    %493 = vmatpush1.msra.mxu0 0.0
    %494 = vmatprep.subr.mxu0 0.0
    %495 = vmatpush1.msra.mxu0 0.0
    %496 = vmatprep.subr.mxu0 0.0
    %497 = vmatpush1.msra.mxu0 0.0
    %498 = vmatprep.subr.mxu0 0.0
    %499 = vmatpush1.msra.mxu0 0.0
    %500 = vmatprep.subr.mxu0 0.0
    %501 = vmatpush1.msra.mxu0 0.0
    %502 = vmatprep.subr.mxu0 0.0
    %503 = vmatpush1.msra.mxu0 0.0
    %504 = vmatprep.subr.mxu0 0.0
    %505 = vmatpush1.msra.mxu0 0.0
    %506 = vmatprep.mubr.f32.mxu0 0.0
    %507 = vmatmul.mubr.f32.gmra.mrb[0].mxu0 %v360
    %v508 = vpop.f32.mrb[0].mxu0
    %v509 = vadd.f32 0.0, %v508
    %v510 = vpop.f32.mrb[0].mxu0
    %511 = vmatprep.mubr.f32.mxu0 0.0
    %512 = vmatmul.mubr.f32.gmra.mrb[0].mxu0 %v363
    %v513 = vpop.f32.mrb[0].mxu0
    %v514 = vadd.f32 0.0, %v513
    %v515 = vpop.f32.mrb[0].mxu0
    %516 = vdwg.mxu0
    %v517 = vld [vmem:[#allocation7] sm:$0xff]
    %v518 = vld [vmem:[#allocation7 + $0x8] sm:$0xff]
    %v519 = vld [vmem:[#allocation7 + $0x10] sm:$0xff]
    %v520 = vld [vmem:[#allocation7 + $0x18] sm:$0xff]
    %v521 = vld [vmem:[#allocation7 + $0x20] sm:$0xff]
    %v522 = vld [vmem:[#allocation7 + $0x28] sm:$0xff]
    %v523 = vld [vmem:[#allocation7 + $0x30] sm:$0xff]
    %v524 = vld [vmem:[#allocation7 + $0x38] sm:$0xff]
    %v525 = vld [vmem:[#allocation7 + $0x40] sm:$0xff]
    %v526 = vld [vmem:[#allocation7 + $0x48] sm:$0xff]
    %v527 = vld [vmem:[#allocation7 + $0x50] sm:$0xff]
    %v528 = vld [vmem:[#allocation7 + $0x58] sm:$0xff]
    %v529 = vld [vmem:[#allocation7 + $0x60] sm:$0xff]
    %v530 = vld [vmem:[#allocation7 + $0x68] sm:$0xff]
    %v531 = vld [vmem:[#allocation7 + $0x70] sm:$0xff]
    %v532 = vld [vmem:[#allocation7 + $0x78] sm:$0xff]
    %533 = vmatprep.subr.mxu0 0.0
    %534 = vmatpush1.msra.mxu0 %v517
    %535 = vmatprep.subr.mxu0 0.0
    %536 = vmatpush1.msra.mxu0 %v518
    %537 = vmatprep.subr.mxu0 0.0
    %538 = vmatpush1.msra.mxu0 %v519
    %539 = vmatprep.subr.mxu0 0.0
    %540 = vmatpush1.msra.mxu0 %v520
    %541 = vmatprep.subr.mxu0 0.0
    %542 = vmatpush1.msra.mxu0 %v521
    %543 = vmatprep.subr.mxu0 0.0
    %544 = vmatpush1.msra.mxu0 %v522
    %545 = vmatprep.subr.mxu0 0.0
    %546 = vmatpush1.msra.mxu0 %v523
    %547 = vmatprep.subr.mxu0 0.0
    %548 = vmatpush1.msra.mxu0 %v524
    %549 = vmatprep.subr.mxu0 0.0
    %550 = vmatpush1.msra.mxu0 %v525
    %551 = vmatprep.subr.mxu0 0.0
    %552 = vmatpush1.msra.mxu0 %v526
    %553 = vmatprep.subr.mxu0 0.0
    %554 = vmatpush1.msra.mxu0 %v527
    %555 = vmatprep.subr.mxu0 0.0
    %556 = vmatpush1.msra.mxu0 %v528
    %557 = vmatprep.subr.mxu0 0.0
    %558 = vmatpush1.msra.mxu0 %v529
    %559 = vmatprep.subr.mxu0 0.0
    %560 = vmatpush1.msra.mxu0 %v530
    %561 = vmatprep.subr.mxu0 0.0
    %562 = vmatpush1.msra.mxu0 %v531
    %563 = vmatprep.subr.mxu0 0.0
    %564 = vmatpush1.msra.mxu0 %v532
    %565 = vmatprep.subr.mxu0 0.0
    %566 = vmatpush1.msra.mxu0 0.0
    %567 = vmatprep.subr.mxu0 0.0
    %568 = vmatpush1.msra.mxu0 0.0
    %569 = vmatprep.subr.mxu0 0.0
    %570 = vmatpush1.msra.mxu0 0.0
    %571 = vmatprep.subr.mxu0 0.0
    %572 = vmatpush1.msra.mxu0 0.0
    %573 = vmatprep.subr.mxu0 0.0
    %574 = vmatpush1.msra.mxu0 0.0
    %575 = vmatprep.subr.mxu0 0.0
    %576 = vmatpush1.msra.mxu0 0.0
    %577 = vmatprep.subr.mxu0 0.0
    %578 = vmatpush1.msra.mxu0 0.0
    %579 = vmatprep.subr.mxu0 0.0
    %580 = vmatpush1.msra.mxu0 0.0
    %581 = vmatprep.subr.mxu0 0.0
    %582 = vmatpush1.msra.mxu0 0.0
    %583 = vmatprep.subr.mxu0 0.0
    %584 = vmatpush1.msra.mxu0 0.0
    %585 = vmatprep.subr.mxu0 0.0
    %586 = vmatpush1.msra.mxu0 0.0
    %587 = vmatprep.subr.mxu0 0.0
    %588 = vmatpush1.msra.mxu0 0.0
    %589 = vmatprep.subr.mxu0 0.0
    %590 = vmatpush1.msra.mxu0 0.0
    %591 = vmatprep.subr.mxu0 0.0
    %592 = vmatpush1.msra.mxu0 0.0
    %593 = vmatprep.subr.mxu0 0.0
    %594 = vmatpush1.msra.mxu0 0.0
    %595 = vmatprep.subr.mxu0 0.0
    %596 = vmatpush1.msra.mxu0 0.0
    %597 = vmatprep.mubr.f32.mxu0 0.0
    %598 = vmatmul.mubr.f32.gmra.mrb[0].mxu0 %v432
    %v599 = vpop.f32.mrb[0].mxu0
    %v600 = vadd.f32 0.0, %v599
    %v601 = vpop.f32.mrb[0].mxu0
    %602 = vmatprep.mubr.f32.mxu0 0.0
    %603 = vmatmul.mubr.f32.gmra.mrb[0].mxu0 %v438
    %v604 = vpop.f32.mrb[0].mxu0
    %v605 = vadd.f32 0.0, %v604
    %v606 = vpop.f32.mrb[0].mxu0
    %607 = vdwg.mxu0
    %608 = vmatprep.subr.mxu0 0.0
    %609 = vmatpush1.msra.mxu0 %v517
    %610 = vmatprep.subr.mxu0 0.0
    %611 = vmatpush1.msra.mxu0 %v518
    %612 = vmatprep.subr.mxu0 0.0
    %613 = vmatpush1.msra.mxu0 %v519
    %614 = vmatprep.subr.mxu0 0.0
    %615 = vmatpush1.msra.mxu0 %v520
    %616 = vmatprep.subr.mxu0 0.0
    %617 = vmatpush1.msra.mxu0 %v521
    %618 = vmatprep.subr.mxu0 0.0
    %619 = vmatpush1.msra.mxu0 %v522
    %620 = vmatprep.subr.mxu0 0.0
    %621 = vmatpush1.msra.mxu0 %v523
    %622 = vmatprep.subr.mxu0 0.0
    %623 = vmatpush1.msra.mxu0 %v524
    %624 = vmatprep.subr.mxu0 0.0
    %625 = vmatpush1.msra.mxu0 %v525
    %626 = vmatprep.subr.mxu0 0.0
    %627 = vmatpush1.msra.mxu0 %v526
    %628 = vmatprep.subr.mxu0 0.0
    %629 = vmatpush1.msra.mxu0 %v527
    %630 = vmatprep.subr.mxu0 0.0
    %631 = vmatpush1.msra.mxu0 %v528
    %632 = vmatprep.subr.mxu0 0.0
    %633 = vmatpush1.msra.mxu0 %v529
    %634 = vmatprep.subr.mxu0 0.0
    %635 = vmatpush1.msra.mxu0 %v530
    %636 = vmatprep.subr.mxu0 0.0
    %637 = vmatpush1.msra.mxu0 %v531
    %638 = vmatprep.subr.mxu0 0.0
    %639 = vmatpush1.msra.mxu0 %v532
    %640 = vmatprep.subr.mxu0 0.0
    %641 = vmatpush1.msra.mxu0 0.0
    %642 = vmatprep.subr.mxu0 0.0
    %643 = vmatpush1.msra.mxu0 0.0
    %644 = vmatprep.subr.mxu0 0.0
    %645 = vmatpush1.msra.mxu0 0.0
    %646 = vmatprep.subr.mxu0 0.0
    %647 = vmatpush1.msra.mxu0 0.0
    %648 = vmatprep.subr.mxu0 0.0
    %649 = vmatpush1.msra.mxu0 0.0
    %650 = vmatprep.subr.mxu0 0.0
    %651 = vmatpush1.msra.mxu0 0.0
    %652 = vmatprep.subr.mxu0 0.0
    %653 = vmatpush1.msra.mxu0 0.0
    %654 = vmatprep.subr.mxu0 0.0
    %655 = vmatpush1.msra.mxu0 0.0
    %656 = vmatprep.subr.mxu0 0.0
    %657 = vmatpush1.msra.mxu0 0.0
    %658 = vmatprep.subr.mxu0 0.0
    %659 = vmatpush1.msra.mxu0 0.0
    %660 = vmatprep.subr.mxu0 0.0
    %661 = vmatpush1.msra.mxu0 0.0
    %662 = vmatprep.subr.mxu0 0.0
    %663 = vmatpush1.msra.mxu0 0.0
    %664 = vmatprep.subr.mxu0 0.0
    %665 = vmatpush1.msra.mxu0 0.0
    %666 = vmatprep.subr.mxu0 0.0
    %667 = vmatpush1.msra.mxu0 0.0
    %668 = vmatprep.subr.mxu0 0.0
    %669 = vmatpush1.msra.mxu0 0.0
    %670 = vmatprep.subr.mxu0 0.0
    %671 = vmatpush1.msra.mxu0 0.0
    %672 = vmatprep.mubr.f32.mxu0 0.0
    %673 = vmatmul.mubr.f32.gmra.mrb[0].mxu0 %v434
    %v674 = vpop.f32.mrb[0].mxu0
    %v675 = vadd.f32 0.0, %v674
    %v676 = vpop.f32.mrb[0].mxu0
    %677 = vmatprep.mubr.f32.mxu0 0.0
    %678 = vmatmul.mubr.f32.gmra.mrb[0].mxu0 %v440
    %v679 = vpop.f32.mrb[0].mxu0
    %v680 = vadd.f32 0.0, %v679
    %v681 = vpop.f32.mrb[0].mxu0
    %682 = vdwg.mxu0
    %683 = vmatprep.subr.mxu0 0.0
    %684 = vmatpush1.msra.mxu0 %v517
    %685 = vmatprep.subr.mxu0 0.0
    %686 = vmatpush1.msra.mxu0 %v518
    %687 = vmatprep.subr.mxu0 0.0
    %688 = vmatpush1.msra.mxu0 %v519
    %689 = vmatprep.subr.mxu0 0.0
    %690 = vmatpush1.msra.mxu0 %v520
    %691 = vmatprep.subr.mxu0 0.0
    %692 = vmatpush1.msra.mxu0 %v521
    %693 = vmatprep.subr.mxu0 0.0
    %694 = vmatpush1.msra.mxu0 %v522
    %695 = vmatprep.subr.mxu0 0.0
    %696 = vmatpush1.msra.mxu0 %v523
    %697 = vmatprep.subr.mxu0 0.0
    %698 = vmatpush1.msra.mxu0 %v524
    %699 = vmatprep.subr.mxu0 0.0
    %700 = vmatpush1.msra.mxu0 %v525
    %701 = vmatprep.subr.mxu0 0.0
    %702 = vmatpush1.msra.mxu0 %v526
    %703 = vmatprep.subr.mxu0 0.0
    %704 = vmatpush1.msra.mxu0 %v527
    %705 = vmatprep.subr.mxu0 0.0
    %706 = vmatpush1.msra.mxu0 %v528
    %707 = vmatprep.subr.mxu0 0.0
    %708 = vmatpush1.msra.mxu0 %v529
    %709 = vmatprep.subr.mxu0 0.0
    %710 = vmatpush1.msra.mxu0 %v530
    %711 = vmatprep.subr.mxu0 0.0
    %712 = vmatpush1.msra.mxu0 %v531
    %713 = vmatprep.subr.mxu0 0.0
    %714 = vmatpush1.msra.mxu0 %v532
    %715 = vmatprep.subr.mxu0 0.0
    %716 = vmatpush1.msra.mxu0 0.0
    %717 = vmatprep.subr.mxu0 0.0
    %718 = vmatpush1.msra.mxu0 0.0
    %719 = vmatprep.subr.mxu0 0.0
    %720 = vmatpush1.msra.mxu0 0.0
    %721 = vmatprep.subr.mxu0 0.0
    %722 = vmatpush1.msra.mxu0 0.0
    %723 = vmatprep.subr.mxu0 0.0
    %724 = vmatpush1.msra.mxu0 0.0
    %725 = vmatprep.subr.mxu0 0.0
    %726 = vmatpush1.msra.mxu0 0.0
    %727 = vmatprep.subr.mxu0 0.0
    %728 = vmatpush1.msra.mxu0 0.0
    %729 = vmatprep.subr.mxu0 0.0
    %730 = vmatpush1.msra.mxu0 0.0
    %731 = vmatprep.subr.mxu0 0.0
    %732 = vmatpush1.msra.mxu0 0.0
    %733 = vmatprep.subr.mxu0 0.0
    %734 = vmatpush1.msra.mxu0 0.0
    %735 = vmatprep.subr.mxu0 0.0
    %736 = vmatpush1.msra.mxu0 0.0
    %737 = vmatprep.subr.mxu0 0.0
    %738 = vmatpush1.msra.mxu0 0.0
    %739 = vmatprep.subr.mxu0 0.0
    %740 = vmatpush1.msra.mxu0 0.0
    %741 = vmatprep.subr.mxu0 0.0
    %742 = vmatpush1.msra.mxu0 0.0
    %743 = vmatprep.subr.mxu0 0.0
    %744 = vmatpush1.msra.mxu0 0.0
    %745 = vmatprep.subr.mxu0 0.0
    %746 = vmatpush1.msra.mxu0 0.0
    %747 = vmatprep.mubr.f32.mxu0 0.0
    %748 = vmatmul.mubr.f32.gmra.mrb[0].mxu0 %v509
    %v749 = vpop.f32.mrb[0].mxu0
    %v750 = vadd.f32 0.0, %v749
    %v751 = vpop.f32.mrb[0].mxu0
    %752 = vmatprep.mubr.f32.mxu0 0.0
    %753 = vmatmul.mubr.f32.gmra.mrb[0].mxu0 %v514
    %v754 = vpop.f32.mrb[0].mxu0
    %v755 = vadd.f32 0.0, %v754
    %v756 = vpop.f32.mrb[0].mxu0
    %757 = vdwg.mxu0
    %v758 = vadd.f32 %v600, %v675
    %v759 = vadd.f32 %v605, %v680
    %v760 = vmul.f32 %v600, %v675
    %v761 = vmul.f32 %v605, %v680
    %v762 = vmul.f32 %v750, %v750
    %v763 = vmul.f32 %v755, %v755
    %v764 = vsub.f32 %v760, %v762
    %v765 = vsub.f32 %v761, %v763
    %v766 = vmul.f32 %v758, %v758
    %v767 = vmul.f32 %v759, %v759
    %v768 = vmul.f32 %v764, 4.0
    %v769 = vmul.f32 %v765, 4.0
    %v770 = vsub.f32 %v766, %v768
    %v771 = vsub.f32 %v767, %v769
    %v772 = vand.u32 2147483647, %v770
    %v773 = vand.u32 2147483647, %v771
    %v774 = vrsqrt.pop %v772
    %v775 = vmul.f32 %v772, %v774
    %vm776 = vcmp.eq.f32.partialorder %v772, inf
    %v777 = vsel %vm776, %v772, %v775
    %vm778 = vcmp.eq.f32.partialorder %v772, 0.0
    %v779 = vand.u32 %v772, 2147483648
    %v780 = vsel %vm778, %v779, %v777
    %v781 = vrsqrt.pop %v773
    %v782 = vmul.f32 %v773, %v781
    %vm783 = vcmp.eq.f32.partialorder %v773, inf
    %v784 = vsel %vm783, %v773, %v782
    %vm785 = vcmp.eq.f32.partialorder %v773, 0.0
    %v786 = vand.u32 %v773, 2147483648
    %v787 = vsel %vm785, %v786, %v784
    %v788 = vsub.f32 %v758, %v780
    %v789 = vsub.f32 %v759, %v787
    %v790 = vmul.f32 %v788, 0.5
    %v791 = vmul.f32 %v789, 0.5
    %792 = vst [vmem:[#allocation8] sm:$0xff] %v790
    %793 = vst [vmem:[#allocation8 + $0x8] sm:$0xff] %v791
    // Predicated region
    $region38: #{tpu_custom_call.1} parent=1 // pred_check
      _
    $region39: #{tpu_custom_call.1} parent=1 // pred_check_branch
      %795 = sbr.rel (0) target = $region41
    $region40: #{tpu_custom_call.1} parent=1 // pred_region
      %s797 = ssub.s32 256, 256
      %798 = vsyncadd [#allocation4], %s797
      %s799 = sshll.u32 [#allocation8], 4
      %s800 = int_to_ptr.vmem [resolvable:$true] %s799
      %805 = dma.vmem_to_hbm [thread:$0]  %s800, 256, %s6, [#allocation4], 128, 128, 8
    $region41: #{tpu_custom_call.1} parent=1 // pred_fallthru
      _
    // Predicated region
    $region42: #{tpu_custom_call.1} parent=1 // pred_check
      _
    $region43: #{tpu_custom_call.1} parent=1 // pred_check_branch
      %807 = sbr.rel (0) target = $region45
    $region44: #{tpu_custom_call.1} parent=1 // pred_region
      %808 = dma.done [#allocation4], 256
    $region45: #{tpu_custom_call.1} parent=1 // pred_fallthru
      _
    %809 = vsyncpa [#allocation3], 1
    %810 = vsyncpa [#allocation6], 1
    %811 = vsyncpa [#allocation4], 1

</llo_original>
